<compile_context>
chip_gen: v7x
topology: tpu7x:2x2x1
jax: 0.10.0
libtpu: 0.0.40
codegen_flags: <defaults>
</compile_context>

<pallas_src>
import functools

import jax
import jax.numpy as jnp
from jax import lax
from jax.experimental import pallas as pl
from jax.experimental.pallas import tpu as pltpu


def _vmem_limit_bytes():
    try:
        cap = int(pltpu.get_tpu_info().vmem_capacity_bytes)
    except Exception:
        cap = 64 * 1024 * 1024
    # Leave headroom for double-buffering: ~96 MiB on v5e/v6e (128 MiB phys),
    # ~48 MiB on v7x (64 MiB phys).
    return int(min(cap * 3 // 4, 100 * 1024 * 1024))


_VMEM_LIMIT = _vmem_limit_bytes()


def _pick_tile(dim, target, align):
    """Largest `align`-aligned tile <= target that divides dim, else full dim."""
    if dim <= target:
        return dim
    t = (target // align) * align
    while t >= align:
        if dim % t == 0:
            return t
        t -= align
    return dim


def _auto_tn(k_rows, n, budget_bytes=8 << 20):
    """Largest lane-aligned N tile whose bf16 weight slab (k_rows, tn) fits budget."""
    if n <= 128 or k_rows * n * 2 <= budget_bytes:
        return n
    t = max(128, int(budget_bytes // (k_rows * 2)) // 128 * 128)
    return _pick_tile(n, int(t), 128)


# --------------------------------------------------------------------------
# Generic row matmul: out[b] = f(a[b]) @ w + bias (+ add[b])  [+ fused stats]
#   f = optional per-(sample, channel) affine (fused GroupNorm) and/or SiLU.
# --------------------------------------------------------------------------

def _make_row_matmul_kernel(has_gn, silu, has_add, want_stats):
    def kernel(*refs):
        it = iter(refs)
        a_ref = next(it)                               # (1, tm, K)
        w_ref = next(it)                               # (K, tn) bf16
        b_ref = next(it)                               # (1, tn)  f32
        sc_ref = next(it) if has_gn else None          # (1, K)   f32
        sh_ref = next(it) if has_gn else None          # (1, K)   f32
        add_ref = next(it) if has_add else None        # (1, tm, tn)
        o_ref = next(it)                               # (1, tm, tn)
        st_ref = next(it) if want_stats else None      # (1, 2, tn) f32

        a = a_ref[0].astype(jnp.float32)
        if has_gn:
            a = a * sc_ref[...] + sh_ref[...]          # fused GroupNorm affine
        if silu:
            a = a * jax.nn.sigmoid(a)
        r = jnp.dot(a.astype(jnp.bfloat16), w_ref[...],
                    preferred_element_type=jnp.float32)
        r = r + b_ref[...]
        if has_add:
            r = r + add_ref[0].astype(jnp.float32)
        o_ref[0] = r.astype(o_ref.dtype)

        if want_stats:
            i = pl.program_id(2)                       # M axis (innermost)

            @pl.when(i == 0)
            def _():
                st_ref[...] = jnp.zeros_like(st_ref)

            s1 = jnp.sum(r, axis=0, keepdims=True)
            s2 = jnp.sum(r * r, axis=0, keepdims=True)
            st_ref[0] += jnp.concatenate([s1, s2], axis=0)

    return kernel


def row_matmul(a, w, bias, *, scale=None, shift=None, silu=False, add=None,
               want_stats=False, out_dtype=jnp.bfloat16,
               tm_target=512, tn_budget=8 << 20):
    """a: (B, M, K); w: (K, N); bias: (N,); scale/shift: (B, K); add: (B, M, N).
    Returns (B, M, N) [, (B, 2, N) sum/sumsq of the result]."""
    B, M, K = a.shape
    N = w.shape[1]
    tm = _pick_tile(M, tm_target, 8)
    tn = _auto_tn(K, N, tn_budget)
    nj, ni = N // tn, M // tm

    has_gn = scale is not None
    has_add = add is not None

    # Grid order (b, j, i): M innermost so the (1, 2, tn) stats block stays
    # resident while partial sums accumulate across M tiles.
    in_specs = [
        pl.BlockSpec((1, tm, K), lambda b, j, i: (b, i, 0)),
        pl.BlockSpec((K, tn), lambda b, j, i: (0, j)),
        pl.BlockSpec((1, tn), lambda b, j, i: (0, j)),
    ]
    inputs = [a, w.astype(jnp.bfloat16), bias.reshape(1, N).astype(jnp.float32)]
    if has_gn:
        in_specs += [pl.BlockSpec((1, K), lambda b, j, i: (b, 0)),
                     pl.BlockSpec((1, K), lambda b, j, i: (b, 0))]
        inputs += [scale, shift]
    if has_add:
        in_specs.append(pl.BlockSpec((1, tm, tn), lambda b, j, i: (b, i, j)))
        inputs.append(add)

    out_shape = [jax.ShapeDtypeStruct((B, M, N), out_dtype)]
    out_specs = [pl.BlockSpec((1, tm, tn), lambda b, j, i: (b, i, j))]
    if want_stats:
        out_shape.append(jax.ShapeDtypeStruct((B, 2, N), jnp.float32))
        out_specs.append(pl.BlockSpec((1, 2, tn), lambda b, j, i: (b, 0, j)))

    out = pl.pallas_call(
        _make_row_matmul_kernel(has_gn, silu, has_add, want_stats),
        out_shape=tuple(out_shape),
        grid=(B, nj, ni),
        in_specs=in_specs,
        out_specs=tuple(out_specs),
        compiler_params=pltpu.CompilerParams(
            dimension_semantics=("parallel", "parallel", "arbitrary"),
            vmem_limit_bytes=_VMEM_LIMIT),
    )(*inputs)
    return out if want_stats else out[0]


# --------------------------------------------------------------------------
# Fused GroupNorm + SiLU + 3x3 conv (padding=1) on (B, H*W, C) activations.
# Grid (B, Cout_tiles).  The GN+SiLU'd input is built once per sample (j==0)
# into a zero-padded VMEM scratch; the 9 taps are static shifted slices.
# --------------------------------------------------------------------------

def _make_conv3x3_kernel(L, W, C, pad, has_vec, has_full, want_stats):
    tot = L + 2 * pad

    def kernel(*refs):
        it = iter(refs)
        x_ref = next(it)                               # (1, L, C) bf16
        w_ref = next(it)                               # (9, C, tn) bf16
        b_ref = next(it)                               # (1, tn) f32
        sc_ref = next(it)                              # (1, C) f32
        sh_ref = next(it)                              # (1, C) f32
        vec_ref = next(it) if has_vec else None        # (1, tn) f32
        full_ref = next(it) if has_full else None      # (1, L, tn) bf16
        o_ref = next(it)                               # (1, L, tn)
        st_ref = next(it) if want_stats else None      # (1, 2, tn) f32
        a_ref = next(it)                               # scratch (tot, C) bf16

        j = pl.program_id(1)

        # GroupNorm + SiLU once per sample (f32); reused for every Cout tile.
        @pl.when(j == 0)
        def _():
            x = x_ref[0].astype(jnp.float32)
            x = x * sc_ref[...] + sh_ref[...]
            x = x * jax.nn.sigmoid(x)
            a_ref[0:pad, :] = jnp.zeros((pad, C), jnp.bfloat16)
            a_ref[tot - pad:tot, :] = jnp.zeros((pad, C), jnp.bfloat16)
            a_ref[pad:pad + L, :] = x.astype(jnp.bfloat16)

        # Column masks for taps that look across the left/right image border.
        col = lax.broadcasted_iota(jnp.int32, (L, 1), 0) % W
        mask_l = (col != 0).astype(jnp.bfloat16)       # kw == 0
        mask_r = (col != W - 1).astype(jnp.bfloat16)   # kw == 2

        tn = o_ref.shape[2]
        acc = jnp.zeros((L, tn), jnp.float32)
        for kh in range(3):
            for kw in range(3):
                start = pad + (kh - 1) * W + (kw - 1)
                slab = a_ref[start:start + L, :]       # (L, C) shifted view
                if kw == 0:
                    slab = slab * mask_l
                elif kw == 2:
                    slab = slab * mask_r
                acc += jnp.dot(slab, w_ref[kh * 3 + kw],
                               preferred_element_type=jnp.float32)

        r = acc + b_ref[...]                           # conv bias
        if has_vec:
            r = r + vec_ref[...]                       # time embedding
        if has_full:
            r = r + full_ref[0].astype(jnp.float32)    # residual
        o_ref[0] = r.astype(o_ref.dtype)
        if want_stats:                                 # stats for the next GroupNorm
            s1 = jnp.sum(r, axis=0, keepdims=True)
            s2 = jnp.sum(r * r, axis=0, keepdims=True)
            st_ref[0] = jnp.concatenate([s1, s2], axis=0)

    return kernel


def gn_silu_conv3x3(x_blc, hw, w_torch, bias, scale, shift, *, add_vec=None,
                    add_full=None, want_stats=False, out_dtype=jnp.bfloat16,
                    tn_budget=8 << 20):
    # TODO(synk): add spatial (H) tiling with halo DMA for very large H*W; the
    # bottleneck block's spatial extent fits VMEM as a single block.
    H, W = hw
    B, L, C = x_blc.shape
    Cout = w_torch.shape[0]
    tn = _auto_tn(9 * C, Cout, tn_budget)
    nj = Cout // tn
    pad = ((W + 1 + 7) // 8) * 8                       # zero halo, sublane aligned

    # torch (Cout, Cin, 3, 3) -> (tap=kh*3+kw, Cin, Cout)
    wk = jnp.transpose(w_torch, (2, 3, 1, 0)).reshape(9, C, Cout).astype(jnp.bfloat16)
    bias2 = bias.reshape(1, Cout).astype(jnp.float32)

    has_vec = add_vec is not None
    has_full = add_full is not None

    in_specs = [
        pl.BlockSpec((1, L, C), lambda b, j: (b, 0, 0)),
        pl.BlockSpec((9, C, tn), lambda b, j: (0, 0, j)),
        pl.BlockSpec((1, tn), lambda b, j: (0, j)),
        pl.BlockSpec((1, C), lambda b, j: (b, 0)),
        pl.BlockSpec((1, C), lambda b, j: (b, 0)),
    ]
    inputs = [x_blc, wk, bias2, scale, shift]
    if has_vec:
        in_specs.append(pl.BlockSpec((1, tn), lambda b, j: (b, j)))
        inputs.append(add_vec.astype(jnp.float32))
    if has_full:
        in_specs.append(pl.BlockSpec((1, L, tn), lambda b, j: (b, 0, j)))
        inputs.append(add_full)

    out_shape = [jax.ShapeDtypeStruct((B, L, Cout), out_dtype)]
    out_specs = [pl.BlockSpec((1, L, tn), lambda b, j: (b, 0, j))]
    if want_stats:
        out_shape.append(jax.ShapeDtypeStruct((B, 2, Cout), jnp.float32))
        out_specs.append(pl.BlockSpec((1, 2, tn), lambda b, j: (b, 0, j)))

    out = pl.pallas_call(
        _make_conv3x3_kernel(L, W, C, pad, has_vec, has_full, want_stats),
        out_shape=tuple(out_shape),
        grid=(B, nj),
        in_specs=in_specs,
        out_specs=tuple(out_specs),
        scratch_shapes=[pltpu.VMEM((L + 2 * pad, C), jnp.bfloat16)],
        compiler_params=pltpu.CompilerParams(
            dimension_semantics=("parallel", "arbitrary"),
            vmem_limit_bytes=_VMEM_LIMIT),
    )(*inputs)
    return out if want_stats else out[0]


# --------------------------------------------------------------------------
# Multi-head attention core (qkv in head-major [q_h | k_h | v_h] column layout).
# --------------------------------------------------------------------------

def _attention_kernel(qkv_ref, o_ref, *, num_heads, head_dim, scale):
    # TODO(synk): switch to an online-softmax (flash) KV loop with heads on a
    # grid axis for H*W >= ~256 so the (L, L) scores stay bounded.
    qkv = qkv_ref[0]                                    # (L, 3C) bf16, head-major
    for h in range(num_heads):
        base = 3 * head_dim * h
        q = qkv[:, base:base + head_dim]
        k = qkv[:, base + head_dim:base + 2 * head_dim]
        v = qkv[:, base + 2 * head_dim:base + 3 * head_dim]
        s = lax.dot_general(q, k, (((1,), (1,)), ((), ())),
                            preferred_element_type=jnp.float32) * scale
        s = s - jnp.max(s, axis=-1, keepdims=True)
        p = jnp.exp(s)
        p = p * (1.0 / jnp.sum(p, axis=-1, keepdims=True))
        out_h = jnp.dot(p.astype(jnp.bfloat16), v,
                        preferred_element_type=jnp.float32)
        o_ref[0, :, h * head_dim:(h + 1) * head_dim] = out_h.astype(o_ref.dtype)


def attention_core(qkv_blc, num_heads):
    B, L, C3 = qkv_blc.shape
    C = C3 // 3
    dh = C // num_heads
    return pl.pallas_call(
        functools.partial(_attention_kernel, num_heads=num_heads, head_dim=dh,
                          scale=1.0 / float(dh) ** 0.5),
        out_shape=jax.ShapeDtypeStruct((B, L, C), jnp.bfloat16),
        grid=(B,),
        in_specs=[pl.BlockSpec((1, L, C3), lambda b: (b, 0, 0))],
        out_specs=pl.BlockSpec((1, L, C), lambda b: (b, 0, 0)),
        compiler_params=pltpu.CompilerParams(
            dimension_semantics=("parallel",),
            vmem_limit_bytes=_VMEM_LIMIT),
    )(qkv_blc)


# --------------------------------------------------------------------------
# Plain-XLA glue: GN stat combine, tiny time-embedding FC, weight permutation.
# --------------------------------------------------------------------------

def _gn_affine(stats, gamma, beta, num_groups, n, eps=1e-5):
    """(B, 2, C) sum/sumsq over spatial -> per-(sample, channel) scale/shift."""
    B, _, C = stats.shape
    cg = C // num_groups
    mean_c = stats[:, 0, :] / n
    ex2_c = stats[:, 1, :] / n
    mean_g = mean_c.reshape(B, num_groups, cg).mean(-1)
    ex2_g = ex2_c.reshape(B, num_groups, cg).mean(-1)
    var_g = ex2_g - mean_g * mean_g                     # biased variance (torch)
    rstd = lax.rsqrt(var_g + eps)
    rstd_c = jnp.repeat(rstd, cg, axis=-1)
    mean_cb = jnp.repeat(mean_g, cg, axis=-1)
    scale = rstd_c * gamma[None, :]
    shift = beta[None, :] - mean_cb * scale
    return scale.astype(jnp.float32), shift.astype(jnp.float32)


def silu_linear(t, w_torch, bias):
    # nn.Sequential(SiLU, Linear); M = batch is tiny -> plain XLA.
    t32 = t.astype(jnp.float32)
    a = t32 * jax.nn.sigmoid(t32)
    return a @ w_torch.T.astype(jnp.float32) + bias.astype(jnp.float32)


def _headmajor_qkv(in_w, in_b, num_heads):
    """Permute torch in_proj (3C, C) columns of W^T to [q_h | k_h | v_h] groups."""
    C3, C = in_w.shape
    dh = C // num_heads
    cols = []
    for h in range(num_heads):
        for t in range(3):
            cols.extend(range(t * C + h * dh, t * C + (h + 1) * dh))
    cols = jnp.asarray(cols, dtype=jnp.int32)
    return jnp.take(in_w.T, cols, axis=1), jnp.take(in_b, cols, axis=0)


# --------------------------------------------------------------------------
# Full forward (activations are bf16 (B, H*W, C) between kernels).
# --------------------------------------------------------------------------

def bottleneck_block_forward(x, time_emd, params, *, num_heads, num_groups,
                             conv_num_groups=8):
    B, Cin, H, W = x.shape
    L = H * W

    # NCHW -> channels-last (B, H*W, C), once at entry.
    x_f32 = jnp.transpose(x, (0, 2, 3, 1)).reshape(B, L, Cin).astype(jnp.float32)
    # Entry GroupNorm statistics (tiny, plain XLA); every later GN gets its
    # stats fused into the producing kernel.
    stats_x = jnp.stack([jnp.sum(x_f32, axis=1), jnp.sum(x_f32 * x_f32, axis=1)],
                        axis=1)                                         # (B, 2, Cin)
    xh = x_f32.astype(jnp.bfloat16)

    # ---- residual stage 1 ----
    res0 = row_matmul(xh, params["rc0_w"].reshape(-1, Cin).T, params["rc0_b"])
    t0 = silu_linear(time_emd, params["t0_w"], params["t0_b"])          # (B, Cout)
    sc, sh = _gn_affine(stats_x, params["r1_0"]["gn_g"], params["r1_0"]["gn_b"],
                        conv_num_groups, L)
    h1, st1 = gn_silu_conv3x3(xh, (H, W), params["r1_0"]["w"], params["r1_0"]["b"],
                              sc, sh, add_vec=t0, want_stats=True)
    sc, sh = _gn_affine(st1, params["r1_1"]["gn_g"], params["r1_1"]["gn_b"],
                        conv_num_groups, L)
    h2, st2 = gn_silu_conv3x3(h1, (H, W), params["r1_1"]["w"], params["r1_1"]["b"],
                              sc, sh, add_full=res0, want_stats=True)
    C = h2.shape[-1]

    # ---- attention (GroupNorm fused into the QKV projection) ----
    sc, sh = _gn_affine(st2, params["an_g"], params["an_b"], num_groups, L)
    qkv_w, qkv_b = _headmajor_qkv(params["attn"]["in_w"], params["attn"]["in_b"],
                                  num_heads)
    qkv = row_matmul(h2, qkv_w, qkv_b, scale=sc, shift=sh)
    attn = attention_core(qkv, num_heads)
    h3, st3 = row_matmul(attn, params["attn"]["out_w"].T, params["attn"]["out_b"],
                         add=h2, want_stats=True)                       # proj + residual

    # ---- residual stage 2 ----
    res1 = row_matmul(h3, params["rc1_w"].reshape(C, C).T, params["rc1_b"])
    t1 = silu_linear(time_emd, params["t1_w"], params["t1_b"])
    sc, sh = _gn_affine(st3, params["r2_0"]["gn_g"], params["r2_0"]["gn_b"],
                        conv_num_groups, L)
    h4, st4 = gn_silu_conv3x3(h3, (H, W), params["r2_0"]["w"], params["r2_0"]["b"],
                              sc, sh, add_vec=t1, want_stats=True)
    sc, sh = _gn_affine(st4, params["r2_1"]["gn_g"], params["r2_1"]["gn_b"],
                        conv_num_groups, L)
    h5 = gn_silu_conv3x3(h4, (H, W), params["r2_1"]["w"], params["r2_1"]["b"],
                         sc, sh, add_full=res1, want_stats=False,
                         out_dtype=jnp.float32)

    return jnp.transpose(h5.reshape(B, H, W, C), (0, 3, 1, 2))          # NCHW out


# --------------------------------------------------------------------------
# Deterministic params (torch layouts) and a small smoke test.
# --------------------------------------------------------------------------

def init_params(key, in_channels, out_channels, t_emd_dim):
    def nrm(k, shape, scale=0.05):
        return scale * jax.random.normal(k, shape, jnp.float32)

    keys = iter(jax.random.split(key, 32))

    def conv_block_params(cin, cout):
        return {"gn_g": 1.0 + nrm(next(keys), (cin,), 0.1),
                "gn_b": nrm(next(keys), (cin,), 0.1),
                "w": nrm(next(keys), (cout, cin, 3, 3)),
                "b": nrm(next(keys), (cout,))}

    return {
        "r1_0": conv_block_params(in_channels, out_channels),
        "r1_1": conv_block_params(out_channels, out_channels),
        "r2_0": conv_block_params(out_channels, out_channels),
        "r2_1": conv_block_params(out_channels, out_channels),
        "rc0_w": nrm(next(keys), (out_channels, in_channels, 1, 1)),
        "rc0_b": nrm(next(keys), (out_channels,)),
        "rc1_w": nrm(next(keys), (out_channels, out_channels, 1, 1)),
        "rc1_b": nrm(next(keys), (out_channels,)),
        "t0_w": nrm(next(keys), (out_channels, t_emd_dim)),   # torch Linear layout
        "t0_b": nrm(next(keys), (out_channels,)),
        "t1_w": nrm(next(keys), (out_channels, t_emd_dim)),
        "t1_b": nrm(next(keys), (out_channels,)),
        "an_g": 1.0 + nrm(next(keys), (out_channels,), 0.1),
        "an_b": nrm(next(keys), (out_channels,), 0.1),
        "attn": {"in_w": nrm(next(keys), (3 * out_channels, out_channels)),
                 "in_b": nrm(next(keys), (3 * out_channels,)),
                 "out_w": nrm(next(keys), (out_channels, out_channels)),
                 "out_b": nrm(next(keys), (out_channels,))},
    }


if __name__ == "__main__":
    B, CIN, COUT = 2, 8, 16
    H = W = 8
    T_DIM, NUM_HEADS, NUM_GROUPS = 32, 4, 8

    key = jax.random.PRNGKey(0)
    kp, kx, kt = jax.random.split(key, 3)
    params = init_params(kp, CIN, COUT, T_DIM)
    x = jax.random.normal(kx, (B, CIN, H, W), jnp.float32)
    time_emd = jax.random.normal(kt, (B, T_DIM), jnp.float32)

    out = bottleneck_block_forward(x, time_emd, params,
                                   num_heads=NUM_HEADS, num_groups=NUM_GROUPS)
    out = jax.block_until_ready(out)
    assert out.shape == (B, COUT, H, W) and out.dtype == jnp.float32
    print("KERNEL_OK")
</pallas_src>

<mosaic_0001>
module attributes {stable_mosaic.version = 11 : i64} {
  func.func @kernel(%arg0: i32, %arg1: i32, %arg2: i32, %arg3: memref<1x64x8xbf16, #tpu.memory_space<vmem>>, %arg4: memref<8x16xbf16, #tpu.memory_space<vmem>>, %arg5: memref<1x16xf32, #tpu.memory_space<vmem>>, %arg6: memref<1x64x16xbf16, #tpu.memory_space<vmem>>) attributes {dimension_semantics = [#tpu.dimension_semantics<parallel>, #tpu.dimension_semantics<parallel>, #tpu.dimension_semantics<arbitrary>], iteration_bounds = array<i64: 2, 1, 1>, scalar_prefetch = 0 : i64, scratch_operands = 0 : i64, tpu.core_type = #tpu.core_type<tc>, window_params = [{transform_indices = @transform_0, window_bounds = array<i64: 1, 64, 8>}, {transform_indices = @transform_1, window_bounds = array<i64: 8, 16>}, {transform_indices = @transform_2, window_bounds = array<i64: 1, 16>}, {transform_indices = @transform_3, window_bounds = array<i64: 1, 64, 16>}]} {
    %c0 = arith.constant 0 : index
    %c0_0 = arith.constant 0 : index
    %c0_1 = arith.constant 0 : index
    %0 = vector.load %arg3[%c0, %c0_0, %c0_1] : memref<1x64x8xbf16, #tpu.memory_space<vmem>>, vector<1x64x8xbf16>
    %1 = vector.shape_cast %0 : vector<1x64x8xbf16> to vector<64x8xbf16>
    %2 = arith.extf %1 : vector<64x8xbf16> to vector<64x8xf32>
    %3 = arith.truncf %2 : vector<64x8xf32> to vector<64x8xbf16>
    %c0_2 = arith.constant 0 : index
    %c0_3 = arith.constant 0 : index
    %4 = vector.load %arg4[%c0_2, %c0_3] : memref<8x16xbf16, #tpu.memory_space<vmem>>, vector<8x16xbf16>
    %cst = arith.constant dense<0.000000e+00> : vector<64x16xf32>
    %5 = tpu.matmul %3, %4, %cst {dimension_numbers = #tpu.dot_dimension_numbers<[1], [0], [0], [1], [0, 0, 1, 1], [], []>} : vector<64x8xbf16>, vector<8x16xbf16>, vector<64x16xf32> -> vector<64x16xf32>
    %c0_4 = arith.constant 0 : index
    %c0_5 = arith.constant 0 : index
    %6 = vector.load %arg5[%c0_4, %c0_5] : memref<1x16xf32, #tpu.memory_space<vmem>>, vector<1x16xf32>
    %7 = vector.broadcast %6 : vector<1x16xf32> to vector<64x16xf32>
    %8 = arith.addf %5, %7 : vector<64x16xf32>
    %9 = arith.truncf %8 : vector<64x16xf32> to vector<64x16xbf16>
    %c0_6 = arith.constant 0 : index
    %c0_7 = arith.constant 0 : index
    %c0_8 = arith.constant 0 : index
    %10 = vector.load %arg6[%c0_6, %c0_7, %c0_8] : memref<1x64x16xbf16, #tpu.memory_space<vmem>>, vector<1x64x16xbf16>
    %11 = vector.shape_cast %10 : vector<1x64x16xbf16> to vector<64x16xbf16>
    %12 = vector.shape_cast %9 : vector<64x16xbf16> to vector<1x64x16xbf16>
    tpu.vector_store %arg6[%c0_6, %c0_7, %c0_8], %12 {strides = array<i32>} : memref<1x64x16xbf16, #tpu.memory_space<vmem>>, vector<1x64x16xbf16>,
    return
  }
  func.func @transform_0(%arg0: i32, %arg1: i32, %arg2: i32) -> (i32, i32, i32) {
    %c0_i32 = arith.constant 0 : i32
    %c0_i32_0 = arith.constant 0 : i32
    return %arg0, %arg2, %c0_i32 : i32, i32, i32
  }
  func.func @transform_1(%arg0: i32, %arg1: i32, %arg2: i32) -> (i32, i32) {
    %c0_i32 = arith.constant 0 : i32
    %c0_i32_0 = arith.constant 0 : i32
    return %c0_i32, %arg1 : i32, i32
  }
  func.func @transform_2(%arg0: i32, %arg1: i32, %arg2: i32) -> (i32, i32) {
    %c0_i32 = arith.constant 0 : i32
    %c0_i32_0 = arith.constant 0 : i32
    return %c0_i32, %arg1 : i32, i32
  }
  func.func @transform_3(%arg0: i32, %arg1: i32, %arg2: i32) -> (i32, i32, i32) {
    %c0_i32 = arith.constant 0 : i32
    return %arg0, %arg2, %arg1 : i32, i32, i32
  }
}

</mosaic_0001>

<llo_original>
// kernel: tpu_custom_call.1
$region0: #{tpu_custom_call.1}
  #allocation0 [shape = 'u32[]', space=smem, size = 0x4, offset = 0x4, fixed_abs, tag = 'smem constant byte address 0x4 - core index']
  #allocation1 [shape = 'u32[144,128]{1,0:T(1,128)}', space=vmem, size = 0x12000, scoped, tag = 'internal scratch']
  %s0 = inlined_call_operand.vmem [shape: bf16[2,64,8], index: 0, kind: input, shape index: {}]
  %s1 = inlined_call_operand.vmem [shape: bf16[8,16], index: 1, kind: input, shape index: {}]
  %s2 = inlined_call_operand.vmem [shape: f32[1,16], index: 2, kind: input, shape index: {}]
  %s3 = inlined_call_operand.vmem [shape: bf16[2,64,16], index: 3, kind: output, shape index: {}]
  %s4 = sld [smem:[#allocation0]]
  $region45: #{tpu_custom_call.1} parent=0
    _
  %s6 = ssub.s32 1, %s4
  %s7 = scalar_select 0, %s6, %s4
  loop: start=0, step=1, limit=4
  $region2: #{tpu_custom_call.1} parent=0 // loop_pre_header
    _
  $region3: #{tpu_custom_call.1} parent=0 // loop_header
    %s9 = sphi 0, %s13
    %p10 = scmp.ge.s32.totalorder %s9, 4
    %s16 = sphi 0, %s35
    %s17 = sphi 0, %s31
    %s18 = sphi 0, %s27
    %s19 = sphi 0, %s16
    %s20 = sphi 0, %s17
    %s21 = sphi 0, %s18
    %s22 = sphi 0, %s19
    %s23 = sphi 0, %s20
    %s24 = sphi 0, %s21
    %s40 = sphi 0, %s42
    %s43 = sphi 0, %s40
    %s44 = sphi 0, %s43
    %s60 = sphi 0, %s44
    %s66 = sphi 0, %s68
    %s69 = sphi 0, %s66
    %s70 = sphi 0, %s69
    %s86 = sphi 0, %s70
    %s92 = sphi 0, %s94
    %s95 = sphi 0, %s92
    %s96 = sphi 0, %s95
    %s112 = sphi 0, %s96
    %s122 = sphi 0, %s124
    %s125 = sphi 0, %s122
    %s126 = sphi 0, %s125
    %s142 = sphi 0, %s126
  $region4: #{tpu_custom_call.1} parent=0 // loop_header_branch
    %12 = sbr.rel (%p10) target = $region8
  $region5: #{tpu_custom_call.1} parent=0 // loop_body
    %s14 = ssub.s32 %s9, 1
    %s15 = ssub.s32 %s9, 2
    %s25 = sadd.s32 1, %s18
    %p26 = scmp.ge.s32.totalorder %s25, 1
    %s27 = scalar_select %p26, 0, %s25
    %s28 = sadd.s32 1, %s17
    %s29 = scalar_select %p26, %s28, %s17
    %p30 = scmp.ge.s32.totalorder %s29, 1
    %s31 = scalar_select %p30, 0, %s29
    %s32 = sadd.s32 1, %s16
    %s33 = scalar_select %p30, %s32, %s16
    %p34 = scmp.ge.s32.totalorder %s33, 2
    %s35 = scalar_select %p34, 0, %s33
    %s36 = ssub.s32 %s16, %s35
    %s37 = ssub.s32 %s18, %s27
    %s38 = sor.u32 %s36, %s37
    %p39 = scmp.eq.s32.totalorder %s38, 0
    %s41 = sadd.s32 %s40, 1
    %s42 = scalar_select %p39, %s40, %s41
    %p45 = pneg %p39
    %p46 = scmp.eq.s32.totalorder %s9, 1
    %p47 = por %p45, %p46
    %p48 = scmp.ne.s32.totalorder %s40, %s43
    %p49 = scmp.eq.s32.totalorder %s9, 0
    %p50 = por %p48, %p49
    %p51 = scmp.ne.s32.totalorder %s40, %s43
    %p52 = scmp.eq.s32.totalorder %s14, 1
    %p53 = por %p51, %p52
    %p54 = scmp.ne.s32.totalorder %s43, %s44
    %p55 = scmp.eq.s32.totalorder %s14, 0
    %p56 = por %p54, %p55
    %p57 = scmp.ne.s32.totalorder %s43, %s44
    %p58 = scmp.eq.s32.totalorder %s15, 1
    %p59 = por %p57, %p58
    %p61 = scmp.ne.s32.totalorder %s44, %s60
    %p62 = scmp.eq.s32.totalorder %s15, 0
    %p63 = por %p61, %p62
    %s64 = ssub.s32 %s17, %s31
    %p65 = scmp.eq.s32.totalorder %s64, 0
    %s67 = sadd.s32 %s66, 1
    %s68 = scalar_select %p65, %s66, %s67
    %p71 = pneg %p65
    %p72 = scmp.eq.s32.totalorder %s9, 1
    %p73 = por %p71, %p72
    %p74 = scmp.ne.s32.totalorder %s66, %s69
    %p75 = scmp.eq.s32.totalorder %s9, 0
    %p76 = por %p74, %p75
    %p77 = scmp.ne.s32.totalorder %s66, %s69
    %p78 = scmp.eq.s32.totalorder %s14, 1
    %p79 = por %p77, %p78
    %p80 = scmp.ne.s32.totalorder %s69, %s70
    %p81 = scmp.eq.s32.totalorder %s14, 0
    %p82 = por %p80, %p81
    %p83 = scmp.ne.s32.totalorder %s69, %s70
    %p84 = scmp.eq.s32.totalorder %s15, 1
    %p85 = por %p83, %p84
    %p87 = scmp.ne.s32.totalorder %s70, %s86
    %p88 = scmp.eq.s32.totalorder %s15, 0
    %p89 = por %p87, %p88
    %s90 = ssub.s32 %s17, %s31
    %p91 = scmp.eq.s32.totalorder %s90, 0
    %s93 = sadd.s32 %s92, 1
    %s94 = scalar_select %p91, %s92, %s93
    %p97 = pneg %p91
    %p98 = scmp.eq.s32.totalorder %s9, 1
    %p99 = por %p97, %p98
    %p100 = scmp.ne.s32.totalorder %s92, %s95
    %p101 = scmp.eq.s32.totalorder %s9, 0
    %p102 = por %p100, %p101
    %p103 = scmp.ne.s32.totalorder %s92, %s95
    %p104 = scmp.eq.s32.totalorder %s14, 1
    %p105 = por %p103, %p104
    %p106 = scmp.ne.s32.totalorder %s95, %s96
    %p107 = scmp.eq.s32.totalorder %s14, 0
    %p108 = por %p106, %p107
    %p109 = scmp.ne.s32.totalorder %s95, %s96
    %p110 = scmp.eq.s32.totalorder %s15, 1
    %p111 = por %p109, %p110
    %p113 = scmp.ne.s32.totalorder %s96, %s112
    %p114 = scmp.eq.s32.totalorder %s15, 0
    %p115 = por %p113, %p114
    %s116 = ssub.s32 %s16, %s35
    %s117 = ssub.s32 %s18, %s27
    %s118 = sor.u32 %s116, %s117
    %s119 = ssub.s32 %s17, %s31
    %s120 = sor.u32 %s118, %s119
    %p121 = scmp.eq.s32.totalorder %s120, 0
    %s123 = sadd.s32 %s122, 1
    %s124 = scalar_select %p121, %s122, %s123
    %p127 = pneg %p121
    %p128 = scmp.eq.s32.totalorder %s9, 1
    %p129 = por %p127, %p128
    %p130 = scmp.ne.s32.totalorder %s122, %s125
    %p131 = scmp.eq.s32.totalorder %s9, 0
    %p132 = por %p130, %p131
    %p133 = scmp.ne.s32.totalorder %s122, %s125
    %p134 = scmp.eq.s32.totalorder %s14, 1
    %p135 = por %p133, %p134
    %p136 = scmp.ne.s32.totalorder %s125, %s126
    %p137 = scmp.eq.s32.totalorder %s14, 0
    %p138 = por %p136, %p137
    %p139 = scmp.ne.s32.totalorder %s125, %s126
    %p140 = scmp.eq.s32.totalorder %s15, 1
    %p141 = por %p139, %p140
    %p143 = scmp.ne.s32.totalorder %s126, %s142
    %p144 = scmp.eq.s32.totalorder %s15, 0
    %p145 = por %p143, %p144
    %p146 = scmp.le.s32.totalorder 1, %s9
    %p147 = scmp.lt.s32.totalorder %s9, 3
    %p148 = pnand %p146, %p147
    %p149 = pneg %p148
    // Predicated region
    $region9: #{tpu_custom_call.1} parent=5 // pred_check
      _
    $region10: #{tpu_custom_call.1} parent=5 // pred_check_branch
      %151 = sbr.rel (%p148) target = $region12
    $region11: #{tpu_custom_call.1} parent=5 // pred_region
      %s152 = ssub.s32 %s9, 1
      // Predicated region
      $region13: #{tpu_custom_call.1} parent=11 // pred_check
        %p153 = pneg %p82
      $region14: #{tpu_custom_call.1} parent=11 // pred_check_branch
        %155 = sbr.rel (%p153) target = $region16
      $region15: #{tpu_custom_call.1} parent=11 // pred_region
        %p156 = scmp.lt.s32.totalorder %s20, 0
        %s157 = scalar_select %p156, %s20, 0
        %s158 = smul.addr %s157, 4
        %s159 = scalar_lea.vmem %s1, %s158
      $region16: #{tpu_custom_call.1} parent=11 // pred_fallthru
        _
      // Predicated region
      $region17: #{tpu_custom_call.1} parent=11 // pred_check
        %p160 = pneg %p108
      $region18: #{tpu_custom_call.1} parent=11 // pred_check_branch
        %162 = sbr.rel (%p160) target = $region20
      $region19: #{tpu_custom_call.1} parent=11 // pred_region
        %p163 = scmp.lt.s32.totalorder %s20, 0
        %s164 = scalar_select %p163, %s20, 0
        %s165 = scalar_lea.vmem %s2, %s164
      $region20: #{tpu_custom_call.1} parent=11 // pred_fallthru
        _
    $region12: #{tpu_custom_call.1} parent=5 // pred_fallthru
      _
    %p166 = scmp.lt.s32.totalorder %s9, 2
    // Predicated region
    $region21: #{tpu_custom_call.1} parent=5 // pred_check
      %p167 = pneg %p166
    $region22: #{tpu_custom_call.1} parent=5 // pred_check_branch
      %169 = sbr.rel (%p167) target = $region24
    $region23: #{tpu_custom_call.1} parent=5 // pred_region
      // Predicated region
      $region25: #{tpu_custom_call.1} parent=23 // pred_check
        %p170 = pneg %p50
      $region26: #{tpu_custom_call.1} parent=23 // pred_check_branch
        %172 = sbr.rel (%p170) target = $region28
      $region27: #{tpu_custom_call.1} parent=23 // pred_region
        %s173 = smul.u32 8, %s18
        %p174 = scmp.lt.s32.totalorder %s16, 1
        %s175 = scalar_select %p174, %s16, 1
        %p176 = scmp.lt.s32.totalorder %s173, 7
        %s177 = scalar_select %p176, %s173, 7
        %s178 = smul.addr %s175, 8
        %s179 = sadd.s32 %s177, %s178
        %s180 = smul.addr %s179, 4
        %s181 = scalar_lea.vmem %s0, %s180
        %s182 = smul.u32 8, %s18
      $region28: #{tpu_custom_call.1} parent=23 // pred_fallthru
        _
    $region24: #{tpu_custom_call.1} parent=5 // pred_fallthru
      _
    %p183 = scmp.le.s32.totalorder 1, %s9
    %p184 = scmp.lt.s32.totalorder %s9, 3
    %p185 = pnand %p183, %p184
    %p186 = pneg %p185
    // Predicated region
    $region29: #{tpu_custom_call.1} parent=5 // pred_check
      _
    $region30: #{tpu_custom_call.1} parent=5 // pred_check_branch
      %188 = sbr.rel (%p185) target = $region32
    $region31: #{tpu_custom_call.1} parent=5 // pred_region
      %s189 = ssub.s32 %s9, 1
      %s190 = smul.u32 8, %s21
      %p191 = scmp.lt.s32.totalorder %s19, 1
      %s192 = scalar_select %p191, %s19, 1
      %p193 = scmp.lt.s32.totalorder %s190, 7
      %s194 = scalar_select %p193, %s190, 7
      %s195 = smul.addr %s192, 8
      %s196 = sadd.s32 %s194, %s195
      %s197 = smul.addr %s196, 4
      %s198 = scalar_lea.vmem %s0, %s197
      %p199 = pneg %p56
      %p200 = pneg %p53
      %p201 = scmp.lt.s32.totalorder %s20, 0
      %s202 = scalar_select %p201, %s20, 0
      %s203 = smul.addr %s202, 4
      %s204 = scalar_lea.vmem %s1, %s203
      %p205 = pneg %p82
      %p206 = pneg %p79
      %p207 = scmp.lt.s32.totalorder %s20, 0
      %s208 = scalar_select %p207, %s20, 0
      %s209 = scalar_lea.vmem %s2, %s208
      %p210 = pneg %p108
      %p211 = pneg %p105
      %p212 = pneg %p138
      %p213 = pneg %p135
      %s214 = smul.u32 8, %s21
      %p215 = scmp.lt.s32.totalorder %s19, 1
      %s216 = scalar_select %p215, %s19, 1
      %p217 = scmp.lt.s32.totalorder %s214, 7
      %s218 = scalar_select %p217, %s214, 7
      %p219 = scmp.lt.s32.totalorder %s20, 0
      %s220 = scalar_select %p219, %s20, 0
      %s221 = sadd.s32 %s220, %s218
      %s222 = smul.addr %s216, 8
      %s223 = sadd.s32 %s221, %s222
      %s224 = smul.addr %s223, 4
      %s225 = scalar_lea.vmem %s3, %s224
      %s226 = smul.u32 8, %s21
      %p227 = scmp.lt.s32.totalorder %s19, 1
      %s228 = scalar_select %p227, %s19, 1
      %p229 = scmp.lt.s32.totalorder %s226, 7
      %s230 = scalar_select %p229, %s226, 7
      %s231 = smul.addr %s228, 8
      %s232 = sadd.s32 %s230, %s231
      %s233 = smul.addr %s232, 4
      %s234 = scalar_lea.vmem %s0, %s233
      %s235 = smul.u32 8, %s21
      %p236 = scmp.lt.s32.totalorder %s20, 0
      %s237 = scalar_select %p236, %s20, 0
      %s238 = smul.addr %s237, 4
      %s239 = scalar_lea.vmem %s1, %s238
      %p240 = scmp.lt.s32.totalorder %s20, 0
      %s241 = scalar_select %p240, %s20, 0
      %s242 = scalar_lea.vmem %s2, %s241
      %s243 = smul.u32 8, %s21
      %p244 = scmp.lt.s32.totalorder %s19, 1
      %s245 = scalar_select %p244, %s19, 1
      %p246 = scmp.lt.s32.totalorder %s243, 7
      %s247 = scalar_select %p246, %s243, 7
      %p248 = scmp.lt.s32.totalorder %s20, 0
      %s249 = scalar_select %p248, %s20, 0
      %s250 = sadd.s32 %s249, %s247
      %s251 = smul.addr %s245, 8
      %s252 = sadd.s32 %s250, %s251
      %s253 = smul.addr %s252, 4
      %s254 = scalar_lea.vmem %s3, %s253
      %s255 = smul.u32 8, %s21
      %v257 = vld [vmem:[%s234] sm:$0xf]
      %v258 = vld [vmem:[%s234 + $0x4] sm:$0xf]
      %v259 = vld [vmem:[%s234 + $0x8] sm:$0xf]
      %v260 = vld [vmem:[%s234 + $0xc] sm:$0xf]
      %v261 = vld [vmem:[%s234 + $0x10] sm:$0xf]
      %v262 = vld [vmem:[%s234 + $0x14] sm:$0xf]
      %v263 = vld [vmem:[%s234 + $0x18] sm:$0xf]
      %v264 = vld [vmem:[%s234 + $0x1c] sm:$0xf]
      %v265 = vld [vmem:[%s239] sm:$0xf]
      %v266 = vld [vmem:[%s242] sm:$0x1]
      %v268 = vlaneseq
      %v269 = vshrl.u32 %v268, 7
      %v270 = vsub.s32 0, %v269
      %v271 = vrot.slane %v266, %v270
      %v281 = vunpack.c.l.b16 %v257
      %v282 = vunpack.c.l.b16 %v258
      %v283 = vunpack.c.l.b16 %v259
      %v284 = vunpack.c.l.b16 %v260
      %v285 = vunpack.c.l.b16 %v261
      %v286 = vunpack.c.l.b16 %v262
      %v287 = vunpack.c.l.b16 %v263
      %v288 = vunpack.c.l.b16 %v264
      %v289 = vpack.c.b16 %v282, %v281
      %v290 = vpack.c.b16 %v284, %v283
      %v291 = vpack.c.b16 %v286, %v285
      %v292 = vpack.c.b16 %v288, %v287
      %vm293 = vcmask 64512
      %v295 = vsel %vm293, %v289, 0
      %v298 = vsel %vm293, %v290, 0
      %v301 = vsel %vm293, %v291, 0
      %v304 = vsel %vm293, %v292, 0
      %vm306 = vcmask 1043456
      %v308 = vsel %vm306, %v265, 0
      %310 = vmatprep.subr.bf16.mxu0 0
      %311 = vmatpush1.bf16.msra.mxu0 %v308
      %312 = vmatprep.subr.bf16.mxu0 0
      %313 = vmatpush1.bf16.msra.mxu0 0
      %314 = vmatprep.subr.bf16.mxu0 0
      %315 = vmatpush1.bf16.msra.mxu0 0
      %316 = vmatprep.subr.bf16.mxu0 0
      %317 = vmatpush1.bf16.msra.mxu0 0
      %318 = vmatprep.subr.bf16.mxu0 0
      %319 = vmatpush1.bf16.msra.mxu0 0
      %320 = vmatprep.subr.bf16.mxu0 0
      %321 = vmatpush1.bf16.msra.mxu0 0
      %322 = vmatprep.subr.bf16.mxu0 0
      %323 = vmatpush1.bf16.msra.mxu0 0
      %324 = vmatprep.subr.bf16.mxu0 0
      %325 = vmatpush1.bf16.msra.mxu0 0
      %326 = vmatprep.subr.bf16.mxu0 0
      %327 = vmatpush1.bf16.msra.mxu0 0
      %328 = vmatprep.subr.bf16.mxu0 0
      %329 = vmatpush1.bf16.msra.mxu0 0
      %330 = vmatprep.subr.bf16.mxu0 0
      %331 = vmatpush1.bf16.msra.mxu0 0
      %332 = vmatprep.subr.bf16.mxu0 0
      %333 = vmatpush1.bf16.msra.mxu0 0
      %334 = vmatprep.subr.bf16.mxu0 0
      %335 = vmatpush1.bf16.msra.mxu0 0
      %336 = vmatprep.subr.bf16.mxu0 0
      %337 = vmatpush1.bf16.msra.mxu0 0
      %338 = vmatprep.subr.bf16.mxu0 0
      %339 = vmatpush1.bf16.msra.mxu0 0
      %340 = vmatprep.subr.bf16.mxu0 0
      %341 = vmatpush1.bf16.msra.mxu0 0
      %342 = vmatprep.mubr.bf16.mxu0 0
      %343 = vmatmul.mubr.bf16.gmra.mrb[0].mxu0 %v295
      %v344 = vpop.f32.mrb[0].mxu0
      %v345 = vadd.f32 %v271, %v344
      %v346 = vpop.f32.mrb[0].mxu0
      %v347 = vpop.f32.mrb[0].mxu0
      %v348 = vadd.f32 %v271, %v347
      %v349 = vpop.f32.mrb[0].mxu0
      %350 = vmatprep.mubr.bf16.mxu0 0
      %351 = vmatmul.mubr.bf16.gmra.mrb[0].mxu0 %v298
      %v352 = vpop.f32.mrb[0].mxu0
      %v353 = vadd.f32 %v271, %v352
      %v354 = vpop.f32.mrb[0].mxu0
      %v355 = vpop.f32.mrb[0].mxu0
      %v356 = vadd.f32 %v271, %v355
      %v357 = vpop.f32.mrb[0].mxu0
      %358 = vmatprep.mubr.bf16.mxu0 0
      %359 = vmatmul.mubr.bf16.gmra.mrb[0].mxu0 %v301
      %v360 = vpop.f32.mrb[0].mxu0
      %v361 = vadd.f32 %v271, %v360
      %v362 = vpop.f32.mrb[0].mxu0
      %v363 = vpop.f32.mrb[0].mxu0
      %v364 = vadd.f32 %v271, %v363
      %v365 = vpop.f32.mrb[0].mxu0
      %366 = vmatprep.mubr.bf16.mxu0 0
      %367 = vmatmul.mubr.bf16.gmra.mrb[0].mxu0 %v304
      %v368 = vpop.f32.mrb[0].mxu0
      %v369 = vadd.f32 %v271, %v368
      %v370 = vpop.f32.mrb[0].mxu0
      %v371 = vpop.f32.mrb[0].mxu0
      %v372 = vadd.f32 %v271, %v371
      %v373 = vpop.f32.mrb[0].mxu0
      %374 = vdwg.mxu0
      %v375 = vpack.c.bf16 %v348, %v345
      %v376 = vpack.c.bf16 %v356, %v353
      %v377 = vpack.c.bf16 %v364, %v361
      %v378 = vpack.c.bf16 %v372, %v369
      %v383 = vunpack.c.l.b16 %v375
      %v384 = vunpack.c.h.b16 %v375
      %v385 = vunpack.c.l.b16 %v376
      %v386 = vunpack.c.h.b16 %v376
      %v387 = vunpack.c.l.b16 %v377
      %v388 = vunpack.c.h.b16 %v377
      %v389 = vunpack.c.l.b16 %v378
      %v390 = vunpack.c.h.b16 %v378
      %v391 = vpack.c.b16 %v383, %v383
      %v392 = vpack.c.b16 %v384, %v384
      %v393 = vpack.c.b16 %v385, %v385
      %v394 = vpack.c.b16 %v386, %v386
      %v395 = vpack.c.b16 %v387, %v387
      %v396 = vpack.c.b16 %v388, %v388
      %v397 = vpack.c.b16 %v389, %v389
      %v398 = vpack.c.b16 %v390, %v390
      %vm407 = vcmask 125952
      %408 = vst.msk [vmem:[%s254] sm:$0xf] %vm407, %v391
      %409 = vst.msk [vmem:[%s254 + $0x4] sm:$0xf] %vm407, %v392
      %410 = vst.msk [vmem:[%s254 + $0x8] sm:$0xf] %vm407, %v393
      %411 = vst.msk [vmem:[%s254 + $0xc] sm:$0xf] %vm407, %v394
      %412 = vst.msk [vmem:[%s254 + $0x10] sm:$0xf] %vm407, %v395
      %413 = vst.msk [vmem:[%s254 + $0x14] sm:$0xf] %vm407, %v396
      %414 = vst.msk [vmem:[%s254 + $0x18] sm:$0xf] %vm407, %v397
      %415 = vst.msk [vmem:[%s254 + $0x1c] sm:$0xf] %vm407, %v398
      %s416 = smul.u32 8, %s21
      %p417 = scmp.lt.s32.totalorder %s19, 1
      %s418 = scalar_select %p417, %s19, 1
      %p419 = scmp.lt.s32.totalorder %s416, 7
      %s420 = scalar_select %p419, %s416, 7
      %p421 = scmp.lt.s32.totalorder %s20, 0
      %s422 = scalar_select %p421, %s20, 0
      %s423 = sadd.s32 %s422, %s420
      %s424 = smul.addr %s418, 8
      %s425 = sadd.s32 %s423, %s424
      %s426 = smul.addr %s425, 4
      %s427 = scalar_lea.vmem %s3, %s426
      // Predicated region
      $region33: #{tpu_custom_call.1} parent=31 // pred_check
        %p428 = pneg %p135
      $region34: #{tpu_custom_call.1} parent=31 // pred_check_branch
        %430 = sbr.rel (%p428) target = $region36
      $region35: #{tpu_custom_call.1} parent=31 // pred_region
        %s431 = smul.u32 8, %s21
      $region36: #{tpu_custom_call.1} parent=31 // pred_fallthru
        _
    $region32: #{tpu_custom_call.1} parent=5 // pred_fallthru
      _
    %p432 = scmp.le.s32.totalorder 2, %s9
    // Predicated region
    $region37: #{tpu_custom_call.1} parent=5 // pred_check
      %p433 = pneg %p432
    $region38: #{tpu_custom_call.1} parent=5 // pred_check_branch
      %435 = sbr.rel (%p433) target = $region40
    $region39: #{tpu_custom_call.1} parent=5 // pred_region
      %s436 = ssub.s32 %s9, 2
      // Predicated region
      $region41: #{tpu_custom_call.1} parent=39 // pred_check
        %p437 = pneg %p141
      $region42: #{tpu_custom_call.1} parent=39 // pred_check_branch
        %439 = sbr.rel (%p437) target = $region44
      $region43: #{tpu_custom_call.1} parent=39 // pred_region
        %s440 = smul.u32 8, %s24
        %p441 = scmp.lt.s32.totalorder %s22, 1
        %s442 = scalar_select %p441, %s22, 1
        %p443 = scmp.lt.s32.totalorder %s440, 7
        %s444 = scalar_select %p443, %s440, 7
        %p445 = scmp.lt.s32.totalorder %s23, 0
        %s446 = scalar_select %p445, %s23, 0
        %s447 = sadd.s32 %s446, %s444
        %s448 = smul.addr %s442, 8
        %s449 = sadd.s32 %s447, %s448
        %s450 = smul.addr %s449, 4
        %s451 = scalar_lea.vmem %s3, %s450
      $region44: #{tpu_custom_call.1} parent=39 // pred_fallthru
        _
    $region40: #{tpu_custom_call.1} parent=5 // pred_fallthru
      _
  $region6: #{tpu_custom_call.1} parent=0 // loop_footer
    %s13 = sadd.s32 1, %s9
  $region7: #{tpu_custom_call.1} parent=0 // loop_footer_branch
    %8 = sbr.rel target = $region3
  $region8: #{tpu_custom_call.1} parent=0 // loop_exit
    _

</llo_original>
